<compile_context>
chip_gen: v7x
topology: tpu7x:2x2x1
jax: 0.10.0
libtpu: 0.0.40
codegen_flags: <defaults>
</compile_context>

<pallas_src>
import math
import functools

import jax
import jax.numpy as jnp
from jax import lax
from jax.experimental import pallas as pl
from jax.experimental.pallas import tpu as pltpu


# ----------------------------------------------------------------------------- glue
def fake_quant(x, s, bit):
    """torch forward: scale * clip(trunc(x/scale), -2**bit, 2**bit - 1); .to(int) truncates."""
    max_q = 2.0 ** bit - 1.0
    min_q = -(2.0 ** bit)
    return s * jnp.clip(jnp.trunc(x / s), min_q, max_q)


def tt_to_tensor(factors):
    """TensorTrain reconstruction: factors[i] has shape (r_{i-1}, d_i, r_i), r_0 = r_N = 1."""
    dims = [f.shape[1] for f in factors]
    full = factors[0].reshape(factors[0].shape[1], factors[0].shape[2])
    for f in factors[1:]:
        r_in, d, r_out = f.shape
        full = full.reshape(-1, r_in) @ f.reshape(r_in, d * r_out)
    return full.reshape(dims)


def _round_up(x, m):
    return ((x + m - 1) // m) * m


# --------------------------------------------------------------------------- kernel
def q_conv_kernel(scale_ref, w_ref, p_ref, qb_ref, out_ref, *, bit_b, has_bias):
    # One bf16 x bf16 -> f32 MXU matmul per grid step; the weight block has a constant
    # index_map so it is DMA'd once and stays resident across the whole (parallel) M grid.
    acc = jnp.dot(w_ref[...], p_ref[...], preferred_element_type=jnp.float32)  # (OCp, tM)
    if has_bias:
        s = scale_ref[0]                       # scale_b (SMEM scalar)
        max_q = 2.0 ** bit_b - 1.0
        min_q = -(2.0 ** bit_b)
        # quantize the conv output exactly like torch: clip(trunc(y / scale_b), ...) * scale_b
        acc = jnp.clip(jnp.trunc(acc / s), min_q, max_q) * s
        # add pre-quantized bias (one value per OC row, broadcast along lanes)
        acc = acc + qb_ref[...]
    out_ref[...] = acc.astype(out_ref.dtype)


# -------------------------------------------------------------------------- wrapper
@functools.partial(jax.jit, static_argnames=(
    "out_channels", "in_channels", "kernel_size", "stride", "padding",
    "dilation", "groups", "bit_w", "bit_b"))
def q_tensorized_conv2d(x, factors, bias, scale_w, scale_b, *,
                        out_channels, in_channels, kernel_size,
                        stride=(1, 1), padding=(0, 0), dilation=(1, 1), groups=1,
                        bit_w=8, bit_b=8):
    assert groups == 1  # TODO(synk): grouped conv not implemented (module default is groups=1)

    # --- parameter setup (tiny tensors; plain JAX glue) ---
    q_factors = [fake_quant(f, scale_w, bit_w) for f in factors]
    w = tt_to_tensor(q_factors).reshape(out_channels, in_channels, *kernel_size)

    N, C, H, W = x.shape
    kh, kw = kernel_size
    sh, sw = stride
    ph, pw = padding
    dh, dw = dilation
    Ho = (H + 2 * ph - dh * (kh - 1) - 1) // sh + 1
    Wo = (W + 2 * pw - dw * (kw - 1) - 1) // sw + 1

    M = N * Ho * Wo               # lane (output column) dimension
    K = C * kh * kw               # contraction dimension
    OC = out_channels             # sublane (output row) dimension

    # --- transposed im2col in bf16: patches^T (K, M), built straight from NCHW ---
    # K ordering is offset-major: k = (i*kw + j)*C + c
    xq = x.astype(jnp.bfloat16)
    xp = jnp.pad(xq, ((0, 0), (0, 0), (ph, ph), (pw, pw)))
    xpt = xp.transpose(1, 0, 2, 3)                      # (C, N, Hp, Wp) - cheap, unamplified
    rows = []
    for i in range(kh):
        for j in range(kw):
            rows.append(xpt[:, :,
                            i * dh: i * dh + (Ho - 1) * sh + 1: sh,
                            j * dw: j * dw + (Wo - 1) * sw + 1: sw])   # (C, N, Ho, Wo)
    patches_t = jnp.stack(rows, axis=0).reshape(K, M)                   # bf16 (K, M)

    # weight matrix with matching K ordering: wmat[oc, (i*kw+j)*C + c] = w[oc, c, i, j]
    wmat = w.transpose(0, 2, 3, 1).reshape(OC, K).astype(jnp.bfloat16)  # (OC, K)

    # --- padding: OC only to 8 (sublane), K only to 8, M to the lane tile ---
    OCp = _round_up(OC, 8)
    Kp = _round_up(K, 8)

    # lane tile over M: largest tile that fits a conservative VMEM budget,
    # but keep >= 2 M tiles for small problems so both TensorCores (v7x) get work.
    def working_set(tm):
        return (OCp * Kp * 2            # resident bf16 weight
                + 2 * Kp * tm * 2       # double-buffered bf16 patch tiles
                + 2 * OCp * tm * 4      # double-buffered f32 output tiles
                + OCp * 4)              # bias column
    tM = 1024
    while tM > 128 and working_set(tM) > 32 * 1024 * 1024:
        tM //= 2
    if M <= tM:
        tM = max(128, _round_up((M + 1) // 2, 128))
    Mp = _round_up(M, tM)

    patches_t = jnp.pad(patches_t, ((0, Kp - K), (0, Mp - M)))
    wmat = jnp.pad(wmat, ((0, OCp - OC), (0, Kp - K)))

    has_bias = bias is not None
    if has_bias:
        qbias = fake_quant(bias, scale_b, bit_b).astype(jnp.float32)    # hoisted out of kernel
    else:
        qbias = jnp.zeros((OC,), jnp.float32)
    qbias = jnp.pad(qbias, (0, OCp - OC)).reshape(OCp, 1)

    scalars = jnp.asarray(scale_b, dtype=jnp.float32).reshape(1)        # [scale_b]

    m_tiles = Mp // tM

    kernel = functools.partial(q_conv_kernel, bit_b=bit_b, has_bias=has_bias)
    out_t = pl.pallas_call(
        kernel,
        out_shape=jax.ShapeDtypeStruct((OCp, Mp), jnp.float32),
        grid=(m_tiles,),
        in_specs=[
            pl.BlockSpec(memory_space=pltpu.MemorySpace.SMEM),       # [scale_b]
            pl.BlockSpec((OCp, Kp), lambda i: (0, 0)),               # resident bf16 weight
            pl.BlockSpec((Kp, tM), lambda i: (0, i)),                # patch^T tile (bf16)
            pl.BlockSpec((OCp, 1), lambda i: (0, 0)),                # quantized bias column
        ],
        out_specs=pl.BlockSpec((OCp, tM), lambda i: (0, i)),
        compiler_params=pltpu.CompilerParams(
            dimension_semantics=("parallel",),
            vmem_limit_bytes=48 * 1024 * 1024),
        cost_estimate=pl.CostEstimate(
            flops=2 * M * K * OC,
            transcendentals=0,
            bytes_accessed=Kp * Mp * 2 + OCp * Kp * 2 + OCp * Mp * 4),
    )(scalars, wmat, patches_t, qbias)

    # (OC, N*Ho*Wo) -> NCHW
    out = out_t[:OC, :M].reshape(OC, N, Ho, Wo).transpose(1, 0, 2, 3)
    return out, w


# ------------------------------------------------------------------------ reference
def reference_forward(x, w, bias, scale_b, bit_b, stride, padding, dilation):
    out = lax.conv_general_dilated(
        x, w, window_strides=stride,
        padding=[(padding[0], padding[0]), (padding[1], padding[1])],
        rhs_dilation=dilation,
        dimension_numbers=("NCHW", "OIHW", "NCHW"))
    if bias is not None:
        out = fake_quant(out, scale_b, bit_b)
        qb = fake_quant(bias, scale_b, bit_b)
        out = out + qb[None, :, None, None]
    return out


# ------------------------------------------------------------------------------ main
if __name__ == "__main__":
    key = jax.random.PRNGKey(0)

    # small shapes consistent with the module
    N, Cin, H, W = 2, 4, 16, 16
    Cout = 8
    kernel_size = (3, 3)
    stride, padding, dilation = (1, 1), (1, 1), (1, 1)
    bit_w = bit_b = 8
    scale_w = 2.0 ** -5
    scale_b = 2.0 ** -5

    # TT shape = out-factors + in-factors + kernel dims : (2*4, 2*2, 3, 3) -> (8, 4, 3, 3)
    tt_shape = [2, 4, 2, 2, 3, 3]
    ranks = [1, 3, 3, 3, 3, 3, 1]

    keys = jax.random.split(key, len(tt_shape) + 2)
    factors = [0.5 * jax.random.normal(keys[i], (ranks[i], d, ranks[i + 1]), jnp.float32)
               for i, d in enumerate(tt_shape)]

    n = Cin * kernel_size[0] * kernel_size[1]
    stdv = 1.0 / math.sqrt(n)
    bias = jax.random.uniform(keys[-2], (Cout,), jnp.float32, minval=-stdv, maxval=stdv)
    x = jax.random.normal(keys[-1], (N, Cin, H, W), jnp.float32)

    out, w = q_tensorized_conv2d(
        x, factors, bias, scale_w, scale_b,
        out_channels=Cout, in_channels=Cin, kernel_size=kernel_size,
        stride=stride, padding=padding, dilation=dilation,
        bit_w=bit_w, bit_b=bit_b)
    out = jax.block_until_ready(out)

    ref = reference_forward(x, w, bias, scale_b, bit_b, stride, padding, dilation)
    assert out.shape == ref.shape == (N, Cout, H, W)
    # trunc() is discontinuous; bf16 MXU feed may flip a value at a bin boundary ->
    # allow one quantization step (scale_b) of slack
    max_diff = float(jnp.max(jnp.abs(out - ref)))
    assert max_diff <= scale_b + 1e-5, f"max diff {max_diff}"
    print("KERNEL_OK")
</pallas_src>

<mosaic_0001>
module attributes {stable_mosaic.version = 11 : i64} {
  func.func @q_conv_kernel(%arg0: i32, %arg1: memref<1xf32, #tpu.memory_space<smem>>, %arg2: memref<8x40xbf16, #tpu.memory_space<vmem>>, %arg3: memref<40x256xbf16, #tpu.memory_space<vmem>>, %arg4: memref<8x1xf32, #tpu.memory_space<vmem>>, %arg5: memref<8x256xf32, #tpu.memory_space<vmem>>) attributes {dimension_semantics = [#tpu.dimension_semantics<parallel>], iteration_bounds = array<i64: 2>, scalar_prefetch = 0 : i64, scratch_operands = 0 : i64, tpu.core_type = #tpu.core_type<tc>, window_params = [{transform_indices = @transform_0, window_bounds = array<i64: 1>}, {pipeline_mode = #tpu.pipeline_mode<synchronous>, transform_indices = @transform_1, window_bounds = array<i64: 8, 40>}, {transform_indices = @transform_2, window_bounds = array<i64: 40, 256>}, {pipeline_mode = #tpu.pipeline_mode<synchronous>, transform_indices = @transform_3, window_bounds = array<i64: 8, 1>}, {transform_indices = @transform_4, window_bounds = array<i64: 8, 256>}]} {
    %c0 = arith.constant 0 : index
    %c0_0 = arith.constant 0 : index
    %0 = vector.load %arg2[%c0, %c0_0] : memref<8x40xbf16, #tpu.memory_space<vmem>>, vector<8x40xbf16>
    %c0_1 = arith.constant 0 : index
    %c0_2 = arith.constant 0 : index
    %1 = vector.load %arg3[%c0_1, %c0_2] : memref<40x256xbf16, #tpu.memory_space<vmem>>, vector<40x256xbf16>
    %cst = arith.constant dense<0.000000e+00> : vector<8x256xf32>
    %2 = tpu.matmul %0, %1, %cst {dimension_numbers = #tpu.dot_dimension_numbers<[1], [0], [0], [1], [0, 0, 1, 1], [], []>} : vector<8x40xbf16>, vector<40x256xbf16>, vector<8x256xf32> -> vector<8x256xf32>
    %c0_3 = arith.constant 0 : index
    %3 = memref.load %arg1[%c0_3] : memref<1xf32, #tpu.memory_space<smem>>
    %4 = vector.broadcast %3 : f32 to vector<8x256xf32>
    %5 = arith.divf %2, %4 : vector<8x256xf32>
    %cst_4 = arith.constant 0.000000e+00 : f32
    %6 = vector.broadcast %cst_4 : f32 to vector<8x256xf32>
    %7 = arith.cmpf olt, %5, %6 : vector<8x256xf32>
    %8 = math.ceil %5 : vector<8x256xf32>
    %9 = math.floor %5 : vector<8x256xf32>
    %10 = arith.select %7, %8, %9 : vector<8x256xi1>, vector<8x256xf32>
    %cst_5 = arith.constant -2.560000e+02 : f32
    %cst_6 = arith.constant 2.550000e+02 : f32
    %11 = vector.broadcast %cst_5 : f32 to vector<8x256xf32>
    %12 = arith.maximumf %11, %10 : vector<8x256xf32>
    %13 = vector.broadcast %cst_6 : f32 to vector<8x256xf32>
    %14 = arith.minimumf %13, %12 : vector<8x256xf32>
    %15 = vector.broadcast %3 : f32 to vector<8x256xf32>
    %16 = arith.mulf %14, %15 : vector<8x256xf32>
    %c0_7 = arith.constant 0 : index
    %c0_8 = arith.constant 0 : index
    %17 = vector.load %arg4[%c0_7, %c0_8] : memref<8x1xf32, #tpu.memory_space<vmem>>, vector<8x1xf32>
    %18 = vector.broadcast %17 : vector<8x1xf32> to vector<8x256xf32>
    %19 = arith.addf %16, %18 : vector<8x256xf32>
    %c0_9 = arith.constant 0 : index
    %c0_10 = arith.constant 0 : index
    %20 = vector.load %arg5[%c0_9, %c0_10] : memref<8x256xf32, #tpu.memory_space<vmem>>, vector<8x256xf32>
    tpu.vector_store %arg5[%c0_9, %c0_10], %19 {strides = array<i32>} : memref<8x256xf32, #tpu.memory_space<vmem>>, vector<8x256xf32>,
    return
  }
  func.func @transform_0(%arg0: i32) -> i32 {
    %c0_i32 = arith.constant 0 : i32
    %c0_i32_0 = arith.constant 0 : i32
    return %c0_i32 : i32
  }
  func.func @transform_1(%arg0: i32) -> (i32, i32) {
    %c0_i32 = arith.constant 0 : i32
    %c0_i32_0 = arith.constant 0 : i32
    %c0_i32_1 = arith.constant 0 : i32
    return %c0_i32, %c0_i32_0 : i32, i32
  }
  func.func @transform_2(%arg0: i32) -> (i32, i32) {
    %c0_i32 = arith.constant 0 : i32
    %c0_i32_0 = arith.constant 0 : i32
    return %c0_i32, %arg0 : i32, i32
  }
  func.func @transform_3(%arg0: i32) -> (i32, i32) {
    %c0_i32 = arith.constant 0 : i32
    %c0_i32_0 = arith.constant 0 : i32
    %c0_i32_1 = arith.constant 0 : i32
    return %c0_i32, %c0_i32_0 : i32, i32
  }
  func.func @transform_4(%arg0: i32) -> (i32, i32) {
    %c0_i32 = arith.constant 0 : i32
    %c0_i32_0 = arith.constant 0 : i32
    return %c0_i32, %arg0 : i32, i32
  }
}

</mosaic_0001>

<llo_original>
// kernel: q_tensorized_conv2d.1
$region0: #{q_tensorized_conv2d.1}
  #allocation0 [shape = 'u32[]', space=smem, size = 0x4, offset = 0x4, fixed_abs, tag = 'smem constant byte address 0x4 - core index']
  #allocation1 [shape = 'u32[144,128]{1,0:T(1,128)}', space=vmem, size = 0x12000, scoped, tag = 'internal scratch']
  #allocation2 [shape = 'f32[1]{0:T(128)S(6)}', space=smem, size = 0x200, scoped, tag = 'scoped memory for q_tensorized_conv2d.1']
  %s0 = inlined_call_operand.<no memory space> [shape: f32[1], index: 0, kind: input, shape index: {}]
  %s1 = inlined_call_operand.vmem [shape: bf16[8,40], index: 1, kind: input, shape index: {}]
  %s2 = inlined_call_operand.vmem [shape: bf16[40,512], index: 2, kind: input, shape index: {}]
  %s3 = inlined_call_operand.vmem [shape: f32[8,1], index: 3, kind: input, shape index: {}]
  %s4 = inlined_call_operand.vmem [shape: f32[8,512], index: 4, kind: output, shape index: {}]
  %s5 = sld [smem:[#allocation0]]
  $region87: #{q_tensorized_conv2d.1} parent=0
    _
  %s7 = ssub.s32 1, %s5
  %s8 = scalar_select 0, %s7, %s5
  %9 = sst [smem:[#allocation2]] %s0
  $region1: #{q_tensorized_conv2d.1} parent=0
    #allocation3 [shape = 'u8[40960]{0}', space=vmem, size = 0xa000, scoped, tag = 'input window, operand 2']
    loop: start=0, step=1, limit=4
    $region2: #{q_tensorized_conv2d.1} parent=1 // loop_pre_header
      _
    $region3: #{q_tensorized_conv2d.1} parent=1 // loop_header
      %s11 = sphi 0, %s15
      %p12 = scmp.ge.s32.totalorder %s11, 4
      %s19 = sphi 0, %s19
      %s21 = sphi 0, %s19
      %s22 = sphi 0, %s21
      %s36 = sphi 0, %s22
      %s40 = sphi 0, %s40
      %s42 = sphi 0, %s40
      %s43 = sphi 0, %s42
      %s57 = sphi 0, %s43
      %s63 = sphi 0, %s65
      %s66 = sphi 0, %s63
      %s67 = sphi 0, %s66
      %s83 = sphi 0, %s67
      %s87 = sphi 0, %s87
      %s89 = sphi 0, %s87
      %s90 = sphi 0, %s89
      %s104 = sphi 0, %s90
      %s110 = sphi 0, %s112
      %s113 = sphi 0, %s110
      %s114 = sphi 0, %s113
      %s130 = sphi 0, %s114
    $region4: #{q_tensorized_conv2d.1} parent=1 // loop_header_branch
      %14 = sbr.rel (%p12) target = $region8
    $region5: #{q_tensorized_conv2d.1} parent=1 // loop_body
      %s16 = ssub.s32 %s11, 1
      %s17 = ssub.s32 %s11, 2
      %s18 = sadd.s32 %s11, 1
      %s20 = sadd.s32 %s19, 1
      %p23 = scmp.eq.s32.totalorder %s11, 1
      %p24 = scmp.ne.s32.totalorder %s19, %s21
      %p25 = scmp.eq.s32.totalorder %s11, 0
      %p26 = por %p24, %p25
      %p27 = scmp.ne.s32.totalorder %s19, %s21
      %p28 = scmp.eq.s32.totalorder %s16, 1
      %p29 = por %p27, %p28
      %p30 = scmp.ne.s32.totalorder %s21, %s22
      %p31 = scmp.eq.s32.totalorder %s16, 0
      %p32 = por %p30, %p31
      %p33 = scmp.ne.s32.totalorder %s21, %s22
      %p34 = scmp.eq.s32.totalorder %s17, 1
      %p35 = por %p33, %p34
      %p37 = scmp.ne.s32.totalorder %s22, %s36
      %p38 = scmp.eq.s32.totalorder %s17, 0
      %p39 = por %p37, %p38
      %s41 = sadd.s32 %s40, 1
      %p44 = scmp.eq.s32.totalorder %s11, 1
      %p45 = scmp.ne.s32.totalorder %s40, %s42
      %p46 = scmp.eq.s32.totalorder %s11, 0
      %p47 = por %p45, %p46
      %p48 = scmp.ne.s32.totalorder %s40, %s42
      %p49 = scmp.eq.s32.totalorder %s16, 1
      %p50 = por %p48, %p49
      %p51 = scmp.ne.s32.totalorder %s42, %s43
      %p52 = scmp.eq.s32.totalorder %s16, 0
      %p53 = por %p51, %p52
      %p54 = scmp.ne.s32.totalorder %s42, %s43
      %p55 = scmp.eq.s32.totalorder %s17, 1
      %p56 = por %p54, %p55
      %p58 = scmp.ne.s32.totalorder %s43, %s57
      %p59 = scmp.eq.s32.totalorder %s17, 0
      %p60 = por %p58, %p59
      %s61 = ssub.s32 %s11, %s18
      %p62 = scmp.eq.s32.totalorder %s61, 0
      %s64 = sadd.s32 %s63, 1
      %s65 = scalar_select %p62, %s63, %s64
      %p68 = pneg %p62
      %p69 = scmp.eq.s32.totalorder %s11, 1
      %p70 = por %p68, %p69
      %p71 = scmp.ne.s32.totalorder %s63, %s66
      %p72 = scmp.eq.s32.totalorder %s11, 0
      %p73 = por %p71, %p72
      %p74 = scmp.ne.s32.totalorder %s63, %s66
      %p75 = scmp.eq.s32.totalorder %s16, 1
      %p76 = por %p74, %p75
      %p77 = scmp.ne.s32.totalorder %s66, %s67
      %p78 = scmp.eq.s32.totalorder %s16, 0
      %p79 = por %p77, %p78
      %p80 = scmp.ne.s32.totalorder %s66, %s67
      %p81 = scmp.eq.s32.totalorder %s17, 1
      %p82 = por %p80, %p81
      %p84 = scmp.ne.s32.totalorder %s67, %s83
      %p85 = scmp.eq.s32.totalorder %s17, 0
      %p86 = por %p84, %p85
      %s88 = sadd.s32 %s87, 1
      %p91 = scmp.eq.s32.totalorder %s11, 1
      %p92 = scmp.ne.s32.totalorder %s87, %s89
      %p93 = scmp.eq.s32.totalorder %s11, 0
      %p94 = por %p92, %p93
      %p95 = scmp.ne.s32.totalorder %s87, %s89
      %p96 = scmp.eq.s32.totalorder %s16, 1
      %p97 = por %p95, %p96
      %p98 = scmp.ne.s32.totalorder %s89, %s90
      %p99 = scmp.eq.s32.totalorder %s16, 0
      %p100 = por %p98, %p99
      %p101 = scmp.ne.s32.totalorder %s89, %s90
      %p102 = scmp.eq.s32.totalorder %s17, 1
      %p103 = por %p101, %p102
      %p105 = scmp.ne.s32.totalorder %s90, %s104
      %p106 = scmp.eq.s32.totalorder %s17, 0
      %p107 = por %p105, %p106
      %s108 = ssub.s32 %s11, %s18
      %p109 = scmp.eq.s32.totalorder %s108, 0
      %s111 = sadd.s32 %s110, 1
      %s112 = scalar_select %p109, %s110, %s111
      %p115 = pneg %p109
      %p116 = scmp.eq.s32.totalorder %s11, 1
      %p117 = por %p115, %p116
      %p118 = scmp.ne.s32.totalorder %s110, %s113
      %p119 = scmp.eq.s32.totalorder %s11, 0
      %p120 = por %p118, %p119
      %p121 = scmp.ne.s32.totalorder %s110, %s113
      %p122 = scmp.eq.s32.totalorder %s16, 1
      %p123 = por %p121, %p122
      %p124 = scmp.ne.s32.totalorder %s113, %s114
      %p125 = scmp.eq.s32.totalorder %s16, 0
      %p126 = por %p124, %p125
      %p127 = scmp.ne.s32.totalorder %s113, %s114
      %p128 = scmp.eq.s32.totalorder %s17, 1
      %p129 = por %p127, %p128
      %p131 = scmp.ne.s32.totalorder %s114, %s130
      %p132 = scmp.eq.s32.totalorder %s17, 0
      %p133 = por %p131, %p132
      %p134 = scmp.le.s32.totalorder 1, %s11
      %p135 = scmp.lt.s32.totalorder %s11, 3
      %p136 = pnand %p134, %p135
      %p137 = pneg %p136
      // Predicated region
      $region9: #{q_tensorized_conv2d.1} parent=5 // pred_check
        _
      $region10: #{q_tensorized_conv2d.1} parent=5 // pred_check_branch
        %139 = sbr.rel (%p136) target = $region12
      $region11: #{q_tensorized_conv2d.1} parent=5 // pred_region
        %s140 = ssub.s32 %s11, 1
        // Predicated region
        $region13: #{q_tensorized_conv2d.1} parent=11 // pred_check
          %p141 = pneg %p32
        $region14: #{q_tensorized_conv2d.1} parent=11 // pred_check_branch
          %143 = sbr.rel (%p141) target = $region16
        $region15: #{q_tensorized_conv2d.1} parent=11 // pred_region
          _
        $region16: #{q_tensorized_conv2d.1} parent=11 // pred_fallthru
          _
        // Predicated region
        $region17: #{q_tensorized_conv2d.1} parent=11 // pred_check
          %p144 = pneg %p53
        $region18: #{q_tensorized_conv2d.1} parent=11 // pred_check_branch
          %146 = sbr.rel (%p144) target = $region20
        $region19: #{q_tensorized_conv2d.1} parent=11 // pred_region
          _
        $region20: #{q_tensorized_conv2d.1} parent=11 // pred_fallthru
          _
        // Predicated region
        $region21: #{q_tensorized_conv2d.1} parent=11 // pred_check
          %p147 = pneg %p100
        $region22: #{q_tensorized_conv2d.1} parent=11 // pred_check_branch
          %149 = sbr.rel (%p147) target = $region24
        $region23: #{q_tensorized_conv2d.1} parent=11 // pred_region
          _
        $region24: #{q_tensorized_conv2d.1} parent=11 // pred_fallthru
          _
      $region12: #{q_tensorized_conv2d.1} parent=5 // pred_fallthru
        _
      %p150 = scmp.lt.s32.totalorder %s11, 2
      // Predicated region
      $region25: #{q_tensorized_conv2d.1} parent=5 // pred_check
        %p151 = pneg %p150
      $region26: #{q_tensorized_conv2d.1} parent=5 // pred_check_branch
        %153 = sbr.rel (%p151) target = $region28
      $region27: #{q_tensorized_conv2d.1} parent=5 // pred_region
        // Predicated region
        $region29: #{q_tensorized_conv2d.1} parent=27 // pred_check
          %p154 = pneg %p73
        $region30: #{q_tensorized_conv2d.1} parent=27 // pred_check_branch
          %156 = sbr.rel (%p154) target = $region32
        $region31: #{q_tensorized_conv2d.1} parent=27 // pred_region
          %s157 = sand.u32 %s63, 1
          %s158 = sand.u32 %s63, 1
          %s159 = smul.addr %s158, 40
          %s160 = scalar_lea.vmem [#allocation3], %s159
          %s161 = smul.u32 2, %s11
          %s162 = smul.addr %s161, 4
          %s163 = scalar_lea.vmem %s2, %s162
          // Predicated region
          $region33: #{q_tensorized_conv2d.1} parent=31 // pred_check
            _
          $region34: #{q_tensorized_conv2d.1} parent=31 // pred_check_branch
            %165 = sbr.rel (0) target = $region36
          $region35: #{q_tensorized_conv2d.1} parent=31 // pred_region
            // Predicated region
            $region37: #{q_tensorized_conv2d.1} parent=35 // pred_check
              _
            $region38: #{q_tensorized_conv2d.1} parent=35 // pred_check_branch
              %167 = sbr.rel (0) target = $region40
            $region39: #{q_tensorized_conv2d.1} parent=35 // pred_region
              // Predicated region
              $region52: #{q_tensorized_conv2d.1} parent=39 // pred_check
                _
              $region53: #{q_tensorized_conv2d.1} parent=39 // pred_check_branch
                %190 = sbr.rel (0) target = $region55
              $region54: #{q_tensorized_conv2d.1} parent=39 // pred_region
                loop: start=0, step=1, limit=1
                $region56: #{q_tensorized_conv2d.1} parent=54 // loop_pre_header
                  _
                $region57: #{q_tensorized_conv2d.1} parent=54 // loop_header
                  %s192 = sphi 0, %s196
                  %p193 = scmp.ge.s32.totalorder %s192, 1
                  %s197 = sphi %s163, %s163
                  %s198 = sphi %s160, %s160
                $region58: #{q_tensorized_conv2d.1} parent=54 // loop_header_branch
                  %195 = sbr.rel (%p193) target = $region62
                $region59: #{q_tensorized_conv2d.1} parent=54 // loop_body
                  %v199 = vld [vmem:[%s197] sm:$0xff]
                  %200 = vst [vmem:[%s198] sm:$0xff] %v199
                  %v201 = vld [vmem:[%s197 + $0x10] sm:$0xff]
                  %202 = vst [vmem:[%s198 + $0x8] sm:$0xff] %v201
                  %v203 = vld [vmem:[%s197 + $0x20] sm:$0xff]
                  %204 = vst [vmem:[%s198 + $0x10] sm:$0xff] %v203
                  %v205 = vld [vmem:[%s197 + $0x30] sm:$0xff]
                  %206 = vst [vmem:[%s198 + $0x18] sm:$0xff] %v205
                  %v207 = vld [vmem:[%s197 + $0x40] sm:$0xff]
                  %208 = vst [vmem:[%s198 + $0x20] sm:$0xff] %v207
                $region60: #{q_tensorized_conv2d.1} parent=54 // loop_footer
                  %s196 = sadd.s32 1, %s192
                $region61: #{q_tensorized_conv2d.1} parent=54 // loop_footer_branch
                  %191 = sbr.rel target = $region57
                $region62: #{q_tensorized_conv2d.1} parent=54 // loop_exit
                  _
              $region55: #{q_tensorized_conv2d.1} parent=39 // pred_fallthru
                _
              // Predicated region
              $region63: #{q_tensorized_conv2d.1} parent=39 // pred_check
                _
              $region64: #{q_tensorized_conv2d.1} parent=39 // pred_check_branch
                %210 = sbr.rel target = $region66
              $region65: #{q_tensorized_conv2d.1} parent=39 // pred_region
                _
              $region66: #{q_tensorized_conv2d.1} parent=39 // pred_fallthru
                _
            $region40: #{q_tensorized_conv2d.1} parent=35 // pred_fallthru
              _
            // Predicated region
            $region41: #{q_tensorized_conv2d.1} parent=35 // pred_check
              _
            $region42: #{q_tensorized_conv2d.1} parent=35 // pred_check_branch
              %169 = sbr.rel target = $region44
            $region43: #{q_tensorized_conv2d.1} parent=35 // pred_region
              loop: start=0, step=1, limit=1
              $region45: #{q_tensorized_conv2d.1} parent=43 // loop_pre_header
                _
              $region46: #{q_tensorized_conv2d.1} parent=43 // loop_header
                %s172 = sphi 0, %s176
                %p173 = scmp.ge.s32.totalorder %s172, 1
                %s177 = sphi %s163, %s163
                %s178 = sphi %s160, %s160
              $region47: #{q_tensorized_conv2d.1} parent=43 // loop_header_branch
                %175 = sbr.rel (%p173) target = $region51
              $region48: #{q_tensorized_conv2d.1} parent=43 // loop_body
                %v179 = vld [vmem:[%s177] sm:$0xff]
                %180 = vst [vmem:[%s178] sm:$0xff] %v179
                %v181 = vld [vmem:[%s177 + $0x10] sm:$0xff]
                %182 = vst [vmem:[%s178 + $0x8] sm:$0xff] %v181
                %v183 = vld [vmem:[%s177 + $0x20] sm:$0xff]
                %184 = vst [vmem:[%s178 + $0x10] sm:$0xff] %v183
                %v185 = vld [vmem:[%s177 + $0x30] sm:$0xff]
                %186 = vst [vmem:[%s178 + $0x18] sm:$0xff] %v185
                %v187 = vld [vmem:[%s177 + $0x40] sm:$0xff]
                %188 = vst [vmem:[%s178 + $0x20] sm:$0xff] %v187
              $region49: #{q_tensorized_conv2d.1} parent=43 // loop_footer
                %s176 = sadd.s32 1, %s172
              $region50: #{q_tensorized_conv2d.1} parent=43 // loop_footer_branch
                %171 = sbr.rel target = $region46
              $region51: #{q_tensorized_conv2d.1} parent=43 // loop_exit
                _
            $region44: #{q_tensorized_conv2d.1} parent=35 // pred_fallthru
              _
          $region36: #{q_tensorized_conv2d.1} parent=31 // pred_fallthru
            _
          %211 = vnop
        $region32: #{q_tensorized_conv2d.1} parent=27 // pred_fallthru
          _
      $region28: #{q_tensorized_conv2d.1} parent=5 // pred_fallthru
        _
      %p212 = scmp.le.s32.totalorder 1, %s11
      %p213 = scmp.lt.s32.totalorder %s11, 3
      %p214 = pnand %p212, %p213
      %p215 = pneg %p214
      // Predicated region
      $region67: #{q_tensorized_conv2d.1} parent=5 // pred_check
        _
      $region68: #{q_tensorized_conv2d.1} parent=5 // pred_check_branch
        %217 = sbr.rel (%p214) target = $region70
      $region69: #{q_tensorized_conv2d.1} parent=5 // pred_region
        %s218 = ssub.s32 %s11, 1
        %s219 = sand.u32 %s66, 1
        %s220 = sand.u32 %s66, 1
        %s221 = smul.addr %s220, 40
        %s222 = scalar_lea.vmem [#allocation3], %s221
        // Predicated region
        $region71: #{q_tensorized_conv2d.1} parent=69 // pred_check
          %p223 = pneg %p79
        $region72: #{q_tensorized_conv2d.1} parent=69 // pred_check_branch
          %225 = sbr.rel (%p223) target = $region74
        $region73: #{q_tensorized_conv2d.1} parent=69 // pred_region
          _
        $region74: #{q_tensorized_conv2d.1} parent=69 // pred_fallthru
          _
        %p226 = pneg %p32
        %p227 = pneg %p29
        %p228 = pneg %p53
        %p229 = pneg %p50
        %s230 = sand.u32 %s66, 1
        %s231 = sand.u32 %s66, 1
        %s232 = smul.addr %s231, 40
        %s233 = scalar_lea.vmem [#allocation3], %s232
        %p234 = pneg %p79
        %p235 = pneg %p76
        %p236 = pneg %p100
        %p237 = pneg %p97
        %p238 = pneg %p126
        %p239 = pneg %p123
        %s240 = smul.u32 2, %s16
        %p241 = scmp.lt.s32.totalorder %s240, 3
        %s242 = scalar_select %p241, %s240, 3
        %s243 = smul.addr %s242, 8
        %s244 = scalar_lea.vmem %s4, %s243
        %s245 = smul.u32 2, %s16
        %s246 = smul.u32 2, %s16
        %p247 = scmp.lt.s32.totalorder %s246, 3
        %s248 = scalar_select %p247, %s246, 3
        %s249 = smul.addr %s248, 8
        %s250 = scalar_lea.vmem %s4, %s249
        %s251 = smul.u32 2, %s16
        %v253 = vld [vmem:[%s1] sm:$0xf]
        %v254 = vld [vmem:[%s222] sm:$0xff]
        %v255 = vld [vmem:[%s222 + $0x8] sm:$0xff]
        %v256 = vld [vmem:[%s222 + $0x10] sm:$0xff]
        %v257 = vld [vmem:[%s222 + $0x18] sm:$0xff]
        %v258 = vld [vmem:[%s222 + $0x20] sm:$0xff]
        %v264 = vunpack.c.l.b16 %v254
        %v265 = vunpack.c.h.b16 %v254
        %v266 = vunpack.c.l.b16 %v255
        %v267 = vunpack.c.h.b16 %v255
        %v268 = vunpack.c.l.b16 %v256
        %v269 = vunpack.c.h.b16 %v256
        %v270 = vunpack.c.l.b16 %v257
        %v271 = vunpack.c.h.b16 %v257
        %v272 = vunpack.c.l.b16 %v258
        %v273 = vunpack.c.h.b16 %v258
        %v274 = vpack.c.b16 %v266, %v264
        %v275 = vpack.c.b16 %v267, %v265
        %v276 = vpack.c.b16 %v270, %v268
        %v277 = vpack.c.b16 %v271, %v269
        %v278 = vpack.c.b16 %v272, %v272
        %v279 = vpack.c.b16 %v273, %v273
        %vm284 = vcmask 326656
        %v286 = vsel %vm284, %v253, 0
        %vm288 = vcmask 1043456
        %v290 = vsel %vm288, %v278, 0
        %v293 = vsel %vm288, %v279, 0
        %295 = vmatprep.subr.bf16.mxu0 %v275
        %296 = vmatpush1.bf16.msra.mxu0 %v274
        %297 = vmatprep.subr.bf16.mxu0 %v277
        %298 = vmatpush1.bf16.msra.mxu0 %v276
        %299 = vmatprep.subr.bf16.mxu0 %v293
        %300 = vmatpush1.bf16.msra.mxu0 %v290
        %301 = vmatprep.subr.bf16.mxu0 0
        %302 = vmatpush1.bf16.msra.mxu0 0
        %303 = vmatprep.subr.bf16.mxu0 0
        %304 = vmatpush1.bf16.msra.mxu0 0
        %305 = vmatprep.subr.bf16.mxu0 0
        %306 = vmatpush1.bf16.msra.mxu0 0
        %307 = vmatprep.subr.bf16.mxu0 0
        %308 = vmatpush1.bf16.msra.mxu0 0
        %309 = vmatprep.subr.bf16.mxu0 0
        %310 = vmatpush1.bf16.msra.mxu0 0
        %311 = vmatprep.subr.bf16.mxu0 0
        %312 = vmatpush1.bf16.msra.mxu0 0
        %313 = vmatprep.subr.bf16.mxu0 0
        %314 = vmatpush1.bf16.msra.mxu0 0
        %315 = vmatprep.subr.bf16.mxu0 0
        %316 = vmatpush1.bf16.msra.mxu0 0
        %317 = vmatprep.subr.bf16.mxu0 0
        %318 = vmatpush1.bf16.msra.mxu0 0
        %319 = vmatprep.subr.bf16.mxu0 0
        %320 = vmatpush1.bf16.msra.mxu0 0
        %321 = vmatprep.subr.bf16.mxu0 0
        %322 = vmatpush1.bf16.msra.mxu0 0
        %323 = vmatprep.subr.bf16.mxu0 0
        %324 = vmatpush1.bf16.msra.mxu0 0
        %325 = vmatprep.subr.bf16.mxu0 0
        %326 = vmatpush1.bf16.msra.mxu0 0
        %327 = vmatprep.mubr.bf16.mxu0 0
        %328 = vmatmul.mubr.bf16.gmra.mrb[0].mxu0 %v286
        %v329 = vpop.f32.mrb[0].mxu0
        %v330 = vadd.f32 0.0, %v329
        %v331 = vpop.f32.mrb[0].mxu0
        %v332 = vadd.f32 0.0, %v331
        %v333 = vpop.f32.mrb[0].mxu0
        %v334 = vpop.f32.mrb[0].mxu0
        %335 = vdwg.mxu0
        %s336 = sld [smem:[#allocation2]]
        %v337 = vstv %s336
        %v338 = vrcp.pop %v337
        %v339 = vmul.f32 %v330, %v338
        %v340 = vmul.f32 %v332, %v338
        %vm341 = vcmp.lt.f32.partialorder %v339, 0.0
        %vm342 = vcmp.lt.f32.partialorder %v340, 0.0
        %v343 = vceil.f32 %v339
        %v344 = vceil.f32 %v340
        %v345 = vfloor.f32 %v339
        %v346 = vfloor.f32 %v340
        %v347 = vsel %vm341, %v343, %v345
        %v348 = vsel %vm342, %v344, %v346
        %v349 = vmax.f32 %v347, -256.0
        %v350 = vmax.f32 %v348, -256.0
        %v351 = vmin.f32 %v349, 255.0
        %v352 = vmin.f32 %v350, 255.0
        %v353 = vmul.f32 %v351, %v337
        %v354 = vmul.f32 %v352, %v337
        %v355 = vld [vmem:[%s3] sm:$0xff]
        %357 = vset.pattern.permute.xlu0 0
        %358 = vperm.xlu0 %357, %v355
        %v359 = vpop.permute.xlu0 %358
        %v361 = vadd.f32 %v353, %v359
        %v362 = vadd.f32 %v354, %v359
        %363 = vst [vmem:[%s250] sm:$0xff] %v361
        %364 = vst [vmem:[%s250 + $0x8] sm:$0xff] %v362
        %s365 = smul.u32 2, %s16
        %p366 = scmp.lt.s32.totalorder %s365, 3
        %s367 = scalar_select %p366, %s365, 3
        %s368 = smul.addr %s367, 8
        %s369 = scalar_lea.vmem %s4, %s368
        // Predicated region
        $region75: #{q_tensorized_conv2d.1} parent=69 // pred_check
          %p370 = pneg %p123
        $region76: #{q_tensorized_conv2d.1} parent=69 // pred_check_branch
          %372 = sbr.rel (%p370) target = $region78
        $region77: #{q_tensorized_conv2d.1} parent=69 // pred_region
          %s373 = smul.u32 2, %s16
        $region78: #{q_tensorized_conv2d.1} parent=69 // pred_fallthru
          _
      $region70: #{q_tensorized_conv2d.1} parent=5 // pred_fallthru
        _
      %p374 = scmp.le.s32.totalorder 2, %s11
      // Predicated region
      $region79: #{q_tensorized_conv2d.1} parent=5 // pred_check
        %p375 = pneg %p374
      $region80: #{q_tensorized_conv2d.1} parent=5 // pred_check_branch
        %377 = sbr.rel (%p375) target = $region82
      $region81: #{q_tensorized_conv2d.1} parent=5 // pred_region
        %s378 = ssub.s32 %s11, 2
        // Predicated region
        $region83: #{q_tensorized_conv2d.1} parent=81 // pred_check
          %p379 = pneg %p129
        $region84: #{q_tensorized_conv2d.1} parent=81 // pred_check_branch
          %381 = sbr.rel (%p379) target = $region86
        $region85: #{q_tensorized_conv2d.1} parent=81 // pred_region
          %s382 = smul.u32 2, %s17
          %p383 = scmp.lt.s32.totalorder %s382, 3
          %s384 = scalar_select %p383, %s382, 3
          %s385 = smul.addr %s384, 8
          %s386 = scalar_lea.vmem %s4, %s385
        $region86: #{q_tensorized_conv2d.1} parent=81 // pred_fallthru
          _
      $region82: #{q_tensorized_conv2d.1} parent=5 // pred_fallthru
        _
    $region6: #{q_tensorized_conv2d.1} parent=1 // loop_footer
      %s15 = sadd.s32 1, %s11
    $region7: #{q_tensorized_conv2d.1} parent=1 // loop_footer_branch
      %10 = sbr.rel target = $region3
    $region8: #{q_tensorized_conv2d.1} parent=1 // loop_exit
      _

</llo_original>
